<compile_context>
chip_gen: v7x
topology: tpu7x:2x2x1
jax: 0.10.0
libtpu: 0.0.40
codegen_flags: <defaults>
</compile_context>

<pallas_src>
import jax
import jax.numpy as jnp
from jax.experimental import pallas as pl
from jax.experimental.pallas import tpu as pltpu


def _make_gated_mixed_kernel(k):
    """Kernel closure over the static operand count k."""

    def kernel(coef_ref, *refs):
        # coef_ref    : SMEM (2k,) f32 — interleaved [a_i*(1-a_i), a_i*a_i]
        # refs[:k]    : VMEM (tm, W) tiles of Wxs[i]
        # refs[k:2k]  : VMEM (tm, W) tiles of xs[i]
        # refs[2k]    : VMEM (tm, W) output tile
        out_ref = refs[2 * k]
        acc = None
        for i in range(k):                     # k is static -> fully unrolled
            c1 = coef_ref[2 * i]               # f32 scalars from SMEM
            c2 = coef_ref[2 * i + 1]
            term = (c1 * refs[i][...].astype(jnp.float32)
                    + c2 * refs[k + i][...].astype(jnp.float32))
            acc = term if acc is None else acc + term
        out_ref[...] = acc.astype(out_ref.dtype)   # single downcast at store

    return kernel


def _round_up(x, m):
    return ((x + m - 1) // m) * m


def _sublane_multiple(dtype):
    # Native sublane packing: 8 rows for 32-bit, 16 for 16-bit, 32 for 8-bit.
    itemsize = jnp.dtype(dtype).itemsize
    if itemsize >= 4:
        return 8
    if itemsize == 2:
        return 16
    return 32


def _vmem_capacity_bytes():
    try:
        return int(pltpu.get_tpu_info().vmem_capacity_bytes)
    except Exception:
        return 128 * 1024 * 1024     # v5e/v6e default if the query is unavailable


def gated_mixed_op(raw_alphas, Wxs, xs, *, apply_softmax=True,
                   max_block_rows=None):
    """Pallas implementation of GatedMixedOp.forward.

    raw_alphas: (k,) float32 logits. If apply_softmax=True (default module
                path) a softmax is applied; if False, raw_alphas are used
                directly (covers the alpha_mamba / gaea fixed-alpha paths).
    Wxs, xs:    lists of k arrays, each (B, L, D).
    returns:    (B, L, D)
    """
    k = len(Wxs)
    assert len(xs) == k and raw_alphas.shape == (k,)
    B, L, D = Wxs[0].shape

    # Common dtype via explicit promotion (no silent downcast of mixed inputs).
    dtype = jnp.result_type(*[a.dtype for a in Wxs + xs])
    itemsize = jnp.dtype(dtype).itemsize
    sub = _sublane_multiple(dtype)

    # --- scalar gating coefficients (computed once, outside the kernel) -----
    if apply_softmax:
        alphas = jax.nn.softmax(raw_alphas.astype(jnp.float32), axis=0)
    else:
        alphas = raw_alphas.astype(jnp.float32)
    c1 = alphas * (1.0 - alphas)          # multiplies Wxs[i]
    c2 = alphas * alphas                  # multiplies xs[i]
    coefs = jnp.stack([c1, c2], axis=1).reshape(2 * k)   # (2k,) interleaved

    # --- lane-dense 2D view --------------------------------------------------
    # Flatten to (rows, W) with W a multiple of 128 if possible (free contiguous
    # reshape); otherwise fall back to the natural (B*L, D) full-D-block view.
    T = B * L * D
    W = None
    for g in range(8, 0, -1):             # try 1024, 896, ..., 128
        cand = 128 * g
        if T % cand == 0:
            W = cand
            break
    if W is not None:
        rows = T // W
    else:
        rows, W = B * L, D

    def view(a):
        a = a.astype(dtype) if a.dtype != dtype else a
        return a.reshape(rows, W)          # contiguous reshape: no HBM copy

    ins = [view(w) for w in Wxs] + [view(x) for x in xs]

    # --- tile sizing: generation-aware VMEM budget, sized "from the grid" ----
    n_bufs = (2 * k + 1) * 2               # each ref is double-buffered
    small_vmem = _vmem_capacity_bytes() <= 96 * 1024 * 1024   # v7x: 64 MiB / TC
    budget = (12 if small_vmem else 24) * 1024 * 1024
    vmem_limit = (32 if small_vmem else 48) * 1024 * 1024

    bytes_per_row = W * itemsize
    tm_target = budget // max(1, n_bufs * bytes_per_row)
    # Keep each per-stream per-step DMA chunk >= ~512 KiB when possible ...
    tm_target = max(tm_target, pl.cdiv(512 * 1024, bytes_per_row))
    # ... but never let the pipeline buffers overflow the VMEM limit.
    tm_hard = (vmem_limit * 3 // 4) // max(1, n_bufs * bytes_per_row)
    tm_target = min(tm_target, max(sub, tm_hard))
    if max_block_rows is not None:
        tm_target = min(tm_target, max_block_rows)
    tm_target = max(sub, (tm_target // sub) * sub)

    if tm_target >= rows:
        tm, grid_n = rows, 1               # single full block (full-dim shape OK)
    else:
        grid_n = pl.cdiv(rows, tm_target)
        tm = _round_up(pl.cdiv(rows, grid_n), sub)
        grid_n = pl.cdiv(rows, tm)

    # v7x shards the "parallel" axis over 2 TensorCores: prefer an even grid.
    if small_vmem and grid_n % 2 == 1 and rows > sub:
        g2 = grid_n + 1
        tm2 = _round_up(pl.cdiv(rows, g2), sub)
        if pl.cdiv(rows, tm2) % 2 == 0:
            tm = tm2
            grid_n = pl.cdiv(rows, tm2)

    tile_spec = pl.BlockSpec((tm, W), lambda i: (i, 0))
    out = pl.pallas_call(
        _make_gated_mixed_kernel(k),
        out_shape=jax.ShapeDtypeStruct((rows, W), dtype),
        grid=(grid_n,),
        in_specs=[pl.BlockSpec(memory_space=pltpu.MemorySpace.SMEM)]
                + [tile_spec] * (2 * k),
        out_specs=tile_spec,
        compiler_params=pltpu.CompilerParams(
            dimension_semantics=("parallel",),
            vmem_limit_bytes=vmem_limit),
        cost_estimate=pl.CostEstimate(
            flops=4 * k * T,
            transcendentals=0,
            bytes_accessed=(2 * k + 1) * T * itemsize),
    )(coefs, *ins)

    return out.reshape(B, L, D)


def gated_mixed_op_ref(raw_alphas, Wxs, xs):
    """Pure-JAX f32 reference mirroring the PyTorch forward (softmax path)."""
    alphas = jax.nn.softmax(raw_alphas.astype(jnp.float32), axis=0)
    out = jnp.zeros(Wxs[0].shape, jnp.float32)
    for i in range(len(Wxs)):
        a = alphas[i]
        out = out + a * ((1.0 - a) * Wxs[i].astype(jnp.float32)
                         + a * xs[i].astype(jnp.float32))
    return out


if __name__ == "__main__":
    # GatedMixedOp(k=3): self.alphas = nn.Parameter(torch.zeros(k))  (default path)
    key = jax.random.PRNGKey(0)
    k = 3

    # Case 1: aligned small shape (lane-dense fast path, single grid step).
    B, L, D = 2, 8, 128
    raw_alphas = jnp.zeros((k,), dtype=jnp.float32)
    keys = jax.random.split(key, 2 * k)
    Wxs = [jax.random.normal(keys[i], (B, L, D), dtype=jnp.float32) for i in range(k)]
    xs = [jax.random.normal(keys[k + i], (B, L, D), dtype=jnp.float32) for i in range(k)]
    out = jax.block_until_ready(gated_mixed_op(raw_alphas, Wxs, xs))
    ref = gated_mixed_op_ref(raw_alphas, Wxs, xs)
    assert out.shape == (B, L, D)
    assert jnp.allclose(out, ref, atol=1e-5, rtol=1e-5), "mismatch vs reference (case 1)"

    # Case 2: ragged rows + tiny tile cap -> multi-step grid with a partial
    # last block and NO wrapper-side padding copies.
    B2, L2 = 3, 17
    keys2 = jax.random.split(jax.random.PRNGKey(1), 2 * k + 1)
    raw_alphas2 = jax.random.normal(keys2[-1], (k,), dtype=jnp.float32)
    Wxs2 = [jax.random.normal(keys2[i], (B2, L2, D), dtype=jnp.float32) for i in range(k)]
    xs2 = [jax.random.normal(keys2[k + i], (B2, L2, D), dtype=jnp.float32) for i in range(k)]
    out2 = jax.block_until_ready(
        gated_mixed_op(raw_alphas2, Wxs2, xs2, max_block_rows=8))
    ref2 = gated_mixed_op_ref(raw_alphas2, Wxs2, xs2)
    assert out2.shape == (B2, L2, D)
    assert jnp.allclose(out2, ref2, atol=1e-5, rtol=1e-5), "mismatch vs reference (case 2)"

    # Case 3: D and total element count not multiples of 128 -> (B*L, D)
    # fallback view with full-D blocks (masked lane stores, still no pad copy).
    B3, L3, D3 = 2, 5, 96
    keys3 = jax.random.split(jax.random.PRNGKey(2), 2 * k)
    Wxs3 = [jax.random.normal(keys3[i], (B3, L3, D3), dtype=jnp.float32) for i in range(k)]
    xs3 = [jax.random.normal(keys3[k + i], (B3, L3, D3), dtype=jnp.float32) for i in range(k)]
    out3 = jax.block_until_ready(gated_mixed_op(raw_alphas, Wxs3, xs3))
    ref3 = gated_mixed_op_ref(raw_alphas, Wxs3, xs3)
    assert out3.shape == (B3, L3, D3)
    assert jnp.allclose(out3, ref3, atol=1e-5, rtol=1e-5), "mismatch vs reference (case 3)"

    # Case 4: bf16 inputs, f32 accumulation inside the kernel, single bf16
    # downcast at the output store.
    Wxs4 = [w.astype(jnp.bfloat16) for w in Wxs]
    xs4 = [x.astype(jnp.bfloat16) for x in xs]
    out4 = jax.block_until_ready(gated_mixed_op(raw_alphas, Wxs4, xs4))
    ref4 = gated_mixed_op_ref(raw_alphas, Wxs4, xs4)   # f32 ref on bf16 inputs
    assert out4.dtype == jnp.bfloat16 and out4.shape == (B, L, D)
    assert jnp.allclose(out4.astype(jnp.float32), ref4, atol=2e-2, rtol=2e-2), \
        "mismatch vs reference (case 4, bf16)"

    # TODO(synk): dash (Gumbel-softmax) path needs Gumbel noise on the k logits;
    # only the softmax / fixed-alpha coefficient paths are implemented here.
    print("KERNEL_OK")
</pallas_src>

<mosaic_0001>
module attributes {stable_mosaic.version = 11 : i64} {
  func.func @kernel(%arg0: i32, %arg1: memref<6xf32, #tpu.memory_space<smem>>, %arg2: memref<2x1024xf32, #tpu.memory_space<vmem>>, %arg3: memref<2x1024xf32, #tpu.memory_space<vmem>>, %arg4: memref<2x1024xf32, #tpu.memory_space<vmem>>, %arg5: memref<2x1024xf32, #tpu.memory_space<vmem>>, %arg6: memref<2x1024xf32, #tpu.memory_space<vmem>>, %arg7: memref<2x1024xf32, #tpu.memory_space<vmem>>, %arg8: memref<2x1024xf32, #tpu.memory_space<vmem>>) attributes {dimension_semantics = [#tpu.dimension_semantics<parallel>], iteration_bounds = array<i64: 1>, scalar_prefetch = 0 : i64, scratch_operands = 0 : i64, tpu.core_type = #tpu.core_type<tc>, window_params = [{transform_indices = @transform_0, window_bounds = array<i64: 6>}, {transform_indices = @transform_1, window_bounds = array<i64: 2, 1024>}, {transform_indices = @transform_2, window_bounds = array<i64: 2, 1024>}, {transform_indices = @transform_3, window_bounds = array<i64: 2, 1024>}, {transform_indices = @transform_4, window_bounds = array<i64: 2, 1024>}, {transform_indices = @transform_5, window_bounds = array<i64: 2, 1024>}, {transform_indices = @transform_6, window_bounds = array<i64: 2, 1024>}, {transform_indices = @transform_7, window_bounds = array<i64: 2, 1024>}]} {
    %c0 = arith.constant 0 : index
    %0 = memref.load %arg1[%c0] : memref<6xf32, #tpu.memory_space<smem>>
    %c1 = arith.constant 1 : index
    %1 = memref.load %arg1[%c1] : memref<6xf32, #tpu.memory_space<smem>>
    %c0_0 = arith.constant 0 : index
    %c0_1 = arith.constant 0 : index
    %2 = vector.load %arg2[%c0_0, %c0_1] : memref<2x1024xf32, #tpu.memory_space<vmem>>, vector<2x1024xf32>
    %3 = vector.broadcast %0 : f32 to vector<2x1024xf32>
    %4 = arith.mulf %3, %2 : vector<2x1024xf32>
    %c0_2 = arith.constant 0 : index
    %c0_3 = arith.constant 0 : index
    %5 = vector.load %arg5[%c0_2, %c0_3] : memref<2x1024xf32, #tpu.memory_space<vmem>>, vector<2x1024xf32>
    %6 = vector.broadcast %1 : f32 to vector<2x1024xf32>
    %7 = arith.mulf %6, %5 : vector<2x1024xf32>
    %8 = arith.addf %4, %7 : vector<2x1024xf32>
    %c2 = arith.constant 2 : index
    %9 = memref.load %arg1[%c2] : memref<6xf32, #tpu.memory_space<smem>>
    %c3 = arith.constant 3 : index
    %10 = memref.load %arg1[%c3] : memref<6xf32, #tpu.memory_space<smem>>
    %c0_4 = arith.constant 0 : index
    %c0_5 = arith.constant 0 : index
    %11 = vector.load %arg3[%c0_4, %c0_5] : memref<2x1024xf32, #tpu.memory_space<vmem>>, vector<2x1024xf32>
    %12 = vector.broadcast %9 : f32 to vector<2x1024xf32>
    %13 = arith.mulf %12, %11 : vector<2x1024xf32>
    %c0_6 = arith.constant 0 : index
    %c0_7 = arith.constant 0 : index
    %14 = vector.load %arg6[%c0_6, %c0_7] : memref<2x1024xf32, #tpu.memory_space<vmem>>, vector<2x1024xf32>
    %15 = vector.broadcast %10 : f32 to vector<2x1024xf32>
    %16 = arith.mulf %15, %14 : vector<2x1024xf32>
    %17 = arith.addf %13, %16 : vector<2x1024xf32>
    %18 = arith.addf %8, %17 : vector<2x1024xf32>
    %c4 = arith.constant 4 : index
    %19 = memref.load %arg1[%c4] : memref<6xf32, #tpu.memory_space<smem>>
    %c5 = arith.constant 5 : index
    %20 = memref.load %arg1[%c5] : memref<6xf32, #tpu.memory_space<smem>>
    %c0_8 = arith.constant 0 : index
    %c0_9 = arith.constant 0 : index
    %21 = vector.load %arg4[%c0_8, %c0_9] : memref<2x1024xf32, #tpu.memory_space<vmem>>, vector<2x1024xf32>
    %22 = vector.broadcast %19 : f32 to vector<2x1024xf32>
    %23 = arith.mulf %22, %21 : vector<2x1024xf32>
    %c0_10 = arith.constant 0 : index
    %c0_11 = arith.constant 0 : index
    %24 = vector.load %arg7[%c0_10, %c0_11] : memref<2x1024xf32, #tpu.memory_space<vmem>>, vector<2x1024xf32>
    %25 = vector.broadcast %20 : f32 to vector<2x1024xf32>
    %26 = arith.mulf %25, %24 : vector<2x1024xf32>
    %27 = arith.addf %23, %26 : vector<2x1024xf32>
    %28 = arith.addf %18, %27 : vector<2x1024xf32>
    %c0_12 = arith.constant 0 : index
    %c0_13 = arith.constant 0 : index
    %29 = vector.load %arg8[%c0_12, %c0_13] : memref<2x1024xf32, #tpu.memory_space<vmem>>, vector<2x1024xf32>
    tpu.vector_store %arg8[%c0_12, %c0_13], %28 {strides = array<i32>} : memref<2x1024xf32, #tpu.memory_space<vmem>>, vector<2x1024xf32>,
    return
  }
  func.func @transform_0(%arg0: i32) -> i32 {
    %c0_i32 = arith.constant 0 : i32
    %c0_i32_0 = arith.constant 0 : i32
    return %c0_i32 : i32
  }
  func.func @transform_1(%arg0: i32) -> (i32, i32) {
    %c0_i32 = arith.constant 0 : i32
    %c0_i32_0 = arith.constant 0 : i32
    return %arg0, %c0_i32 : i32, i32
  }
  func.func @transform_2(%arg0: i32) -> (i32, i32) {
    %c0_i32 = arith.constant 0 : i32
    %c0_i32_0 = arith.constant 0 : i32
    return %arg0, %c0_i32 : i32, i32
  }
  func.func @transform_3(%arg0: i32) -> (i32, i32) {
    %c0_i32 = arith.constant 0 : i32
    %c0_i32_0 = arith.constant 0 : i32
    return %arg0, %c0_i32 : i32, i32
  }
  func.func @transform_4(%arg0: i32) -> (i32, i32) {
    %c0_i32 = arith.constant 0 : i32
    %c0_i32_0 = arith.constant 0 : i32
    return %arg0, %c0_i32 : i32, i32
  }
  func.func @transform_5(%arg0: i32) -> (i32, i32) {
    %c0_i32 = arith.constant 0 : i32
    %c0_i32_0 = arith.constant 0 : i32
    return %arg0, %c0_i32 : i32, i32
  }
  func.func @transform_6(%arg0: i32) -> (i32, i32) {
    %c0_i32 = arith.constant 0 : i32
    %c0_i32_0 = arith.constant 0 : i32
    return %arg0, %c0_i32 : i32, i32
  }
  func.func @transform_7(%arg0: i32) -> (i32, i32) {
    %c0_i32 = arith.constant 0 : i32
    %c0_i32_0 = arith.constant 0 : i32
    return %arg0, %c0_i32 : i32, i32
  }
}

</mosaic_0001>

<llo_original>
// kernel: tpu_custom_call.1
$region0: #{tpu_custom_call.1}
  #allocation0 [shape = 'u32[]', space=smem, size = 0x4, offset = 0x4, fixed_abs, tag = 'smem constant byte address 0x4 - core index']
  #allocation1 [shape = 'u32[144,128]{1,0:T(1,128)}', space=vmem, size = 0x12000, scoped, tag = 'internal scratch']
  %s0 = inlined_call_operand.hbm [shape: f32[6], index: 0, kind: input, shape index: {}]
  %s1 = inlined_call_operand.hbm [shape: f32[2,1024], index: 1, kind: input, shape index: {}]
  %s2 = inlined_call_operand.hbm [shape: f32[2,1024], index: 2, kind: input, shape index: {}]
  %s3 = inlined_call_operand.hbm [shape: f32[2,1024], index: 3, kind: input, shape index: {}]
  %s4 = inlined_call_operand.hbm [shape: f32[2,1024], index: 4, kind: input, shape index: {}]
  %s5 = inlined_call_operand.vmem [shape: f32[2,1024], index: 5, kind: input, shape index: {}]
  %s6 = inlined_call_operand.hbm [shape: f32[2,1024], index: 6, kind: input, shape index: {}]
  %s7 = inlined_call_operand.hbm [shape: f32[2,1024], index: 7, kind: output, shape index: {}]
  %s8 = sld [smem:[#allocation0]]
  $region62: #{tpu_custom_call.1} parent=0
    _
  %s10 = ssub.s32 1, %s8
  %s11 = scalar_select 0, %s10, %s8
  $region1: #{tpu_custom_call.1} parent=0
    #allocation2 [shape = 'u8[512]{0}', space=smem, size = 0x200, scoped, tag = 'input window, operand 0, single buffered']
    #allocation3 [shape = 's32[1]{0}', space=sflag, size = 0x4, scoped, tag = 'scoped memory for tpu_custom_call.1']
    #allocation4 [shape = 's32[1]{0}', space=sflag, size = 0x4, scoped, tag = 'scoped memory for tpu_custom_call.1']
    #allocation5 [shape = 's32[1]{0}', space=sflag, size = 0x4, scoped, tag = 'scoped memory for tpu_custom_call.1']
    #allocation6 [shape = 'u8[8192]{0}', space=vmem, size = 0x2000, scoped, tag = 'input window, operand 1, single buffered']
    #allocation7 [shape = 'u8[8192]{0}', space=vmem, size = 0x2000, scoped, tag = 'input window, operand 2, single buffered']
    #allocation8 [shape = 's32[1]{0}', space=sflag, size = 0x4, scoped, tag = 'scoped memory for tpu_custom_call.1']
    #allocation9 [shape = 'u8[8192]{0}', space=vmem, size = 0x2000, scoped, tag = 'input window, operand 3, single buffered']
    #allocation10 [shape = 'u8[8192]{0}', space=vmem, size = 0x2000, scoped, tag = 'input window, operand 4, single buffered']
    #allocation11 [shape = 's32[1]{0}', space=sflag, size = 0x4, scoped, tag = 'scoped memory for tpu_custom_call.1']
    #allocation12 [shape = 'u8[8192]{0}', space=vmem, size = 0x2000, scoped, tag = 'input window, operand 6, single buffered']
    #allocation13 [shape = 'u8[8192]{0}', space=vmem, size = 0x2000, scoped, tag = 'output window, operand 0, single buffered']
    %12 = vsyncpa [#allocation5], 0
    %13 = vsyncpa [#allocation3], 0
    %14 = vsyncpa [#allocation8], 0
    %15 = vsyncpa [#allocation11], 0
    %16 = vsyncpa [#allocation4], 0
    // Predicated region
    $region2: #{tpu_custom_call.1} parent=1 // pred_check
      _
    $region3: #{tpu_custom_call.1} parent=1 // pred_check_branch
      %18 = sbr.rel (0) target = $region5
    $region4: #{tpu_custom_call.1} parent=1 // pred_region
      %s20 = ssub.s32 16, 16
      %21 = vsyncadd [#allocation5], %s20
      %24 = dma.hbm_to_smem %s0, 16, [#allocation2], [#allocation5]
    $region5: #{tpu_custom_call.1} parent=1 // pred_fallthru
      _
    // Predicated region
    $region6: #{tpu_custom_call.1} parent=1 // pred_check
      _
    $region7: #{tpu_custom_call.1} parent=1 // pred_check_branch
      %26 = sbr.rel (0) target = $region9
    $region8: #{tpu_custom_call.1} parent=1 // pred_region
      %s28 = ssub.s32 256, 256
      %29 = vsyncadd [#allocation3], %s28
      %s31 = sshll.u32 [#allocation6], 4
      %s32 = int_to_ptr.vmem [resolvable:$true] %s31
      %34 = dma.hbm_to_vmem [thread:$0]  %s1, 256, %s32, [#allocation3]
    $region9: #{tpu_custom_call.1} parent=1 // pred_fallthru
      _
    // Predicated region
    $region10: #{tpu_custom_call.1} parent=1 // pred_check
      _
    $region11: #{tpu_custom_call.1} parent=1 // pred_check_branch
      %36 = sbr.rel (0) target = $region13
    $region12: #{tpu_custom_call.1} parent=1 // pred_region
      %s38 = ssub.s32 256, 256
      %39 = vsyncadd [#allocation8], %s38
      %s41 = sshll.u32 [#allocation7], 4
      %s42 = int_to_ptr.vmem [resolvable:$true] %s41
      %44 = dma.hbm_to_vmem [thread:$0]  %s2, 256, %s42, [#allocation8]
    $region13: #{tpu_custom_call.1} parent=1 // pred_fallthru
      _
    // Predicated region
    $region14: #{tpu_custom_call.1} parent=1 // pred_check
      _
    $region15: #{tpu_custom_call.1} parent=1 // pred_check_branch
      %46 = sbr.rel (0) target = $region17
    $region16: #{tpu_custom_call.1} parent=1 // pred_region
      %s48 = ssub.s32 256, 256
      %49 = vsyncadd [#allocation8], %s48
      %s51 = sshll.u32 [#allocation9], 4
      %s52 = int_to_ptr.vmem [resolvable:$true] %s51
      %54 = dma.hbm_to_vmem [thread:$0]  %s3, 256, %s52, [#allocation8]
    $region17: #{tpu_custom_call.1} parent=1 // pred_fallthru
      _
    // Predicated region
    $region18: #{tpu_custom_call.1} parent=1 // pred_check
      _
    $region19: #{tpu_custom_call.1} parent=1 // pred_check_branch
      %56 = sbr.rel (0) target = $region21
    $region20: #{tpu_custom_call.1} parent=1 // pred_region
      %s58 = ssub.s32 256, 256
      %59 = vsyncadd [#allocation11], %s58
      %s61 = sshll.u32 [#allocation10], 4
      %s62 = int_to_ptr.vmem [resolvable:$true] %s61
      %64 = dma.hbm_to_vmem [thread:$0]  %s4, 256, %s62, [#allocation11]
    $region21: #{tpu_custom_call.1} parent=1 // pred_fallthru
      _
    // Predicated region
    $region22: #{tpu_custom_call.1} parent=1 // pred_check
      _
    $region23: #{tpu_custom_call.1} parent=1 // pred_check_branch
      %66 = sbr.rel (0) target = $region25
    $region24: #{tpu_custom_call.1} parent=1 // pred_region
      _
    $region25: #{tpu_custom_call.1} parent=1 // pred_fallthru
      _
    // Predicated region
    $region26: #{tpu_custom_call.1} parent=1 // pred_check
      _
    $region27: #{tpu_custom_call.1} parent=1 // pred_check_branch
      %68 = sbr.rel (0) target = $region29
    $region28: #{tpu_custom_call.1} parent=1 // pred_region
      %s70 = ssub.s32 256, 256
      %71 = vsyncadd [#allocation11], %s70
      %s73 = sshll.u32 [#allocation12], 4
      %s74 = int_to_ptr.vmem [resolvable:$true] %s73
      %76 = dma.hbm_to_vmem [thread:$0]  %s6, 256, %s74, [#allocation11]
    $region29: #{tpu_custom_call.1} parent=1 // pred_fallthru
      _
    // Predicated region
    $region30: #{tpu_custom_call.1} parent=1 // pred_check
      _
    $region31: #{tpu_custom_call.1} parent=1 // pred_check_branch
      %78 = sbr.rel (0) target = $region33
    $region32: #{tpu_custom_call.1} parent=1 // pred_region
      %79 = dma.done [#allocation5], 16
    $region33: #{tpu_custom_call.1} parent=1 // pred_fallthru
      _
    // Predicated region
    $region34: #{tpu_custom_call.1} parent=1 // pred_check
      _
    $region35: #{tpu_custom_call.1} parent=1 // pred_check_branch
      %81 = sbr.rel (0) target = $region37
    $region36: #{tpu_custom_call.1} parent=1 // pred_region
      %82 = dma.done [#allocation3], 256
    $region37: #{tpu_custom_call.1} parent=1 // pred_fallthru
      _
    // Predicated region
    $region38: #{tpu_custom_call.1} parent=1 // pred_check
      _
    $region39: #{tpu_custom_call.1} parent=1 // pred_check_branch
      %84 = sbr.rel (0) target = $region41
    $region40: #{tpu_custom_call.1} parent=1 // pred_region
      %85 = dma.done [#allocation8], 256
    $region41: #{tpu_custom_call.1} parent=1 // pred_fallthru
      _
    // Predicated region
    $region42: #{tpu_custom_call.1} parent=1 // pred_check
      _
    $region43: #{tpu_custom_call.1} parent=1 // pred_check_branch
      %87 = sbr.rel (0) target = $region45
    $region44: #{tpu_custom_call.1} parent=1 // pred_region
      %88 = dma.done [#allocation8], 256
    $region45: #{tpu_custom_call.1} parent=1 // pred_fallthru
      _
    // Predicated region
    $region46: #{tpu_custom_call.1} parent=1 // pred_check
      _
    $region47: #{tpu_custom_call.1} parent=1 // pred_check_branch
      %90 = sbr.rel (0) target = $region49
    $region48: #{tpu_custom_call.1} parent=1 // pred_region
      %91 = dma.done [#allocation11], 256
    $region49: #{tpu_custom_call.1} parent=1 // pred_fallthru
      _
    // Predicated region
    $region50: #{tpu_custom_call.1} parent=1 // pred_check
      _
    $region51: #{tpu_custom_call.1} parent=1 // pred_check_branch
      %93 = sbr.rel (0) target = $region53
    $region52: #{tpu_custom_call.1} parent=1 // pred_region
      %94 = dma.done [#allocation11], 256
    $region53: #{tpu_custom_call.1} parent=1 // pred_fallthru
      _
    %95 = sfence
    %s96 = sld [smem:[#allocation2]]
    %s97 = sld [smem:[#allocation2 + $0x1]]
    %v98 = vld [vmem:[#allocation6] sm:$0xff]
    %v99 = vld [vmem:[#allocation6 + $0x8] sm:$0xff]
    %v100 = vstv %s96
    %v101 = vmul.f32 %v100, %v98
    %v102 = vmul.f32 %v100, %v99
    %v103 = vld [vmem:[#allocation10] sm:$0xff]
    %v104 = vld [vmem:[#allocation10 + $0x8] sm:$0xff]
    %v105 = vstv %s97
    %v106 = vmul.f32 %v105, %v103
    %v107 = vmul.f32 %v105, %v104
    %v108 = vadd.f32 %v101, %v106
    %v109 = vadd.f32 %v102, %v107
    %s110 = sld [smem:[#allocation2 + $0x2]]
    %s111 = sld [smem:[#allocation2 + $0x3]]
    %v112 = vld [vmem:[#allocation7] sm:$0xff]
    %v113 = vld [vmem:[#allocation7 + $0x8] sm:$0xff]
    %v114 = vstv %s110
    %v115 = vmul.f32 %v114, %v112
    %v116 = vmul.f32 %v114, %v113
    %v117 = vld [vmem:[%s5] sm:$0xff]
    %v118 = vld [vmem:[%s5 + $0x8] sm:$0xff]
    %v119 = vstv %s111
    %v120 = vmul.f32 %v119, %v117
    %v121 = vmul.f32 %v119, %v118
    %v122 = vadd.f32 %v115, %v120
    %v123 = vadd.f32 %v116, %v121
    %v124 = vadd.f32 %v108, %v122
    %v125 = vadd.f32 %v109, %v123
    %s126 = sld [smem:[#allocation2 + $0x4]]
    %s127 = sld [smem:[#allocation2 + $0x5]]
    %v128 = vld [vmem:[#allocation9] sm:$0xff]
    %v129 = vld [vmem:[#allocation9 + $0x8] sm:$0xff]
    %v130 = vstv %s126
    %v131 = vmul.f32 %v130, %v128
    %v132 = vmul.f32 %v130, %v129
    %v133 = vld [vmem:[#allocation12] sm:$0xff]
    %v134 = vld [vmem:[#allocation12 + $0x8] sm:$0xff]
    %v135 = vstv %s127
    %v136 = vmul.f32 %v135, %v133
    %v137 = vmul.f32 %v135, %v134
    %v138 = vadd.f32 %v131, %v136
    %v139 = vadd.f32 %v132, %v137
    %v140 = vadd.f32 %v124, %v138
    %v141 = vadd.f32 %v125, %v139
    %142 = vst [vmem:[#allocation13] sm:$0xff] %v140
    %143 = vst [vmem:[#allocation13 + $0x8] sm:$0xff] %v141
    // Predicated region
    $region54: #{tpu_custom_call.1} parent=1 // pred_check
      _
    $region55: #{tpu_custom_call.1} parent=1 // pred_check_branch
      %145 = sbr.rel (0) target = $region57
    $region56: #{tpu_custom_call.1} parent=1 // pred_region
      %s147 = ssub.s32 256, 256
      %148 = vsyncadd [#allocation4], %s147
      %s150 = sshll.u32 [#allocation13], 4
      %s151 = int_to_ptr.vmem [resolvable:$true] %s150
      %153 = dma.vmem_to_hbm [thread:$0]  %s151, 256, %s7, [#allocation4]
    $region57: #{tpu_custom_call.1} parent=1 // pred_fallthru
      _
    // Predicated region
    $region58: #{tpu_custom_call.1} parent=1 // pred_check
      _
    $region59: #{tpu_custom_call.1} parent=1 // pred_check_branch
      %155 = sbr.rel (0) target = $region61
    $region60: #{tpu_custom_call.1} parent=1 // pred_region
      %156 = dma.done [#allocation4], 256
    $region61: #{tpu_custom_call.1} parent=1 // pred_fallthru
      _
    %157 = vsyncpa [#allocation3], 1
    %158 = vsyncpa [#allocation8], 1
    %159 = vsyncpa [#allocation11], 1
    %160 = vsyncpa [#allocation4], 1
    %161 = vsyncpa [#allocation5], 1

</llo_original>
